<compile_context>
chip_gen: v7x
topology: tpu7x:2x2x1
jax: 0.10.0
libtpu: 0.0.40
codegen_flags: <defaults>
</compile_context>

<pallas_src>
from typing import NamedTuple

import jax
import jax.numpy as jnp
from jax.experimental import pallas as pl
from jax.experimental.pallas import tpu as pltpu


def _round_up(x: int, m: int) -> int:
    return ((x + m - 1) // m) * m


def _auto_config():
    """Generation-aware (tm, tk, vmem_limit_bytes). Fallback is v7x-safe."""
    tm, tk, vmem_limit = 512, 512, 48 * 1024 * 1024
    try:
        info = pltpu.get_tpu_info()
        vmem_cap = getattr(info, "vmem_capacity_bytes", None)
        if vmem_cap is not None and vmem_cap >= 128 * 1024 * 1024:
            # v5e / v6e: plenty of VMEM -> bigger reduction slice, higher limit.
            tm, tk, vmem_limit = 512, 1024, 96 * 1024 * 1024
    except Exception:
        pass
    return tm, tk, vmem_limit


class FFNParams(NamedTuple):
    """Padded / pre-cast FFN parameters (prepare once, reuse every call)."""
    w1: jax.Array   # [d_model_p, d_int_p]   compute dtype (bf16)
    b1: jax.Array   # [1, d_int_p]           f32
    w2: jax.Array   # [d_int_p, d_model_p]   compute dtype (bf16)
    b2: jax.Array   # [1, d_model_p]         f32
    d_model: int
    d_int: int
    tk: int


def prepare_ffn_params(w1, b1, w2, b2, *, tk: int = 512,
                       compute_dtype=jnp.bfloat16) -> FFNParams:
    """One-time weight prep: cast matmul operands to bf16, pad to lane/tile-aligned
    shapes.  Zero padding is exact: padded d_int columns give GELU(0)==0 and
    contribute nothing; padded d_model columns are sliced off the output.
    Weights are stored [in_features, out_features] (numerically x @ W.T + b)."""
    d_model, d_int = w1.shape
    d_model_p = _round_up(d_model, 128)
    d_int_p = _round_up(d_int, 128)
    tk = min(tk, d_int_p)
    d_int_p = _round_up(d_int_p, tk)

    w1c = jnp.pad(w1.astype(compute_dtype),
                  ((0, d_model_p - d_model), (0, d_int_p - d_int)))
    w2c = jnp.pad(w2.astype(compute_dtype),
                  ((0, d_int_p - d_int), (0, d_model_p - d_model)))
    b1f = jnp.pad(b1.astype(jnp.float32).reshape(1, d_int),
                  ((0, 0), (0, d_int_p - d_int)))
    b2f = jnp.pad(b2.astype(jnp.float32).reshape(1, d_model),
                  ((0, 0), (0, d_model_p - d_model)))
    return FFNParams(w1=w1c, b1=b1f, w2=w2c, b2=b2f,
                     d_model=d_model, d_int=d_int, tk=tk)


def ffn_kernel(x_ref, w1_ref, b1_ref, w2_ref, b2_ref, o_ref, acc_ref):
    """Grid point (i, k): row tile i, d_intermediate slice k (reduction axis)."""
    k = pl.program_id(1)

    # Linear 1 slice: [tm, d_model] @ [d_model, tk]  (bf16 operands, f32 accum).
    h = jnp.dot(x_ref[...], w1_ref[...], preferred_element_type=jnp.float32)
    h = h + b1_ref[...]  # b1 slice [1, tk] broadcasts over rows (f32)

    # GELU (tanh approximation), strength-reduced, f32:
    # 0.5*h*(1 + tanh(0.7978845608028654*(h + 0.044715*h^3)))
    #   = 0.5*h*(1 + tanh(h*(0.7978845608028654 + 0.035677408136300265*h*h)))
    u = h * (0.7978845608028654 + 0.035677408136300265 * (h * h))
    h = 0.5 * h * (1.0 + jnp.tanh(u))

    # TODO(synk): Dropout(p=0.1) is identity in eval/inference mode; training-mode
    # stochastic masking (pltpu.prng_seed + pltpu.prng_random_bits on this tile)
    # is not implemented here.

    # Linear 2 slice: [tm, tk] @ [tk, d_model] contribution (f32 accumulation).
    contrib = jnp.dot(h.astype(w2_ref.dtype), w2_ref[...],
                      preferred_element_type=jnp.float32)

    @pl.when(k == 0)
    def _init():
        # Fold the second-linear bias into the first contribution: no separate
        # zero-init + read-modify-write of the (tm, d_model) f32 accumulator.
        acc_ref[...] = contrib + b2_ref[...]

    @pl.when(k > 0)
    def _accum():
        acc_ref[...] += contrib

    @pl.when(k == pl.num_programs(1) - 1)
    def _finalize():
        o_ref[...] = acc_ref[...].astype(o_ref.dtype)


def ffn_pallas(x, params: FFNParams, *, tm: int | None = None,
               vmem_limit_bytes: int | None = None,
               compute_dtype=jnp.bfloat16):
    """x: [B, S, d_model].  `params` comes from prepare_ffn_params (weights are
    already cast + padded; only the activations are touched per call)."""
    if tm is None or vmem_limit_bytes is None:
        auto_tm, _auto_tk, auto_vmem = _auto_config()
        tm = auto_tm if tm is None else tm
        vmem_limit_bytes = auto_vmem if vmem_limit_bytes is None else vmem_limit_bytes

    B, S, d_model = x.shape
    assert d_model == params.d_model
    out_dtype = x.dtype
    M = B * S

    d_model_p = params.w1.shape[0]
    d_int_p = params.w1.shape[1]
    tk = params.tk

    # Adaptive row tile: never larger than the (16-rounded) token count, so small
    # batches don't stream weights over mostly-zero padding.  tm stays a multiple
    # of 8 (sublane requirement).
    tm = max(8, min(tm, _round_up(M, 16)))
    M_p = _round_up(M, tm)

    # Per-call activation prep only (weights were prepped once).
    x2d = x.reshape(M, d_model).astype(compute_dtype)
    x2d = jnp.pad(x2d, ((0, M_p - M), (0, d_model_p - d_model)))

    grid = (M_p // tm, d_int_p // tk)

    out2d = pl.pallas_call(
        ffn_kernel,
        out_shape=jax.ShapeDtypeStruct((M_p, d_model_p), out_dtype),
        grid_spec=pltpu.PrefetchScalarGridSpec(
            num_scalar_prefetch=0,
            grid=grid,
            in_specs=[
                pl.BlockSpec((tm, d_model_p), lambda i, k: (i, 0)),   # x row tile (resident over k)
                pl.BlockSpec((d_model_p, tk), lambda i, k: (0, k)),   # W1 column slice (streamed)
                pl.BlockSpec((1, tk), lambda i, k: (0, k)),           # b1 slice
                pl.BlockSpec((tk, d_model_p), lambda i, k: (k, 0)),   # W2 row slice (streamed)
                pl.BlockSpec((1, d_model_p), lambda i, k: (0, 0)),    # b2 (resident)
            ],
            out_specs=pl.BlockSpec((tm, d_model_p), lambda i, k: (i, 0)),
            scratch_shapes=[pltpu.VMEM((tm, d_model_p), jnp.float32)],
        ),
        compiler_params=pltpu.CompilerParams(
            dimension_semantics=("parallel", "arbitrary"),
            vmem_limit_bytes=vmem_limit_bytes,
        ),
    )(x2d, params.w1, params.b1, params.w2, params.b2)

    return out2d[:M, :d_model].reshape(B, S, d_model)


def ffn_reference(x, w1, b1, w2, b2):
    h = jnp.einsum("bsd,df->bsf", x.astype(jnp.float32), w1) + b1
    h = 0.5 * h * (1.0 + jnp.tanh(0.7978845608028654 * (h + 0.044715 * h ** 3)))
    y = jnp.einsum("bsf,fd->bsd", h, w2) + b2
    return y.astype(x.dtype)


if __name__ == "__main__":
    # Small, module-consistent shapes: batch=2, seq=8, d_model=32, d_intermediate=64.
    B, S, d_model, d_int = 2, 8, 32, 64

    key = jax.random.PRNGKey(0)
    kx, kw1, kb1, kw2, kb2 = jax.random.split(key, 5)

    x = jax.random.normal(kx, (B, S, d_model), dtype=jnp.float32)
    # Deterministic parameter init (uniform, roughly matching nn.Linear scale).
    lim1 = 1.0 / (d_model ** 0.5)
    lim2 = 1.0 / (d_int ** 0.5)
    w1 = jax.random.uniform(kw1, (d_model, d_int), minval=-lim1, maxval=lim1, dtype=jnp.float32)
    b1 = jax.random.uniform(kb1, (d_int,), minval=-lim1, maxval=lim1, dtype=jnp.float32)
    w2 = jax.random.uniform(kw2, (d_int, d_model), minval=-lim2, maxval=lim2, dtype=jnp.float32)
    b2 = jax.random.uniform(kb2, (d_model,), minval=-lim2, maxval=lim2, dtype=jnp.float32)

    # Auto-select generation-aware tiles; prepare weights ONCE (hoisted out of
    # the per-call path), then run the kernel.
    tm, tk, vmem_limit = _auto_config()
    params = prepare_ffn_params(w1, b1, w2, b2, tk=tk)

    out = ffn_pallas(x, params, tm=tm, vmem_limit_bytes=vmem_limit)
    out = jax.block_until_ready(out)

    ref = ffn_reference(x, w1, b1, w2, b2)
    assert out.shape == (B, S, d_model)
    # bf16 matmul operands (f32 accumulation) => relaxed tolerance vs f32 reference.
    assert jnp.allclose(out, ref, atol=3e-2, rtol=3e-2), float(jnp.max(jnp.abs(out - ref)))

    print("KERNEL_OK")
</pallas_src>

<mosaic_0001>
module attributes {stable_mosaic.version = 11 : i64} {
  func.func @ffn_kernel(%arg0: i32, %arg1: i32, %arg2: memref<16x128xbf16, #tpu.memory_space<vmem>>, %arg3: memref<128x128xbf16, #tpu.memory_space<vmem>>, %arg4: memref<1x128xf32, #tpu.memory_space<vmem>>, %arg5: memref<128x128xbf16, #tpu.memory_space<vmem>>, %arg6: memref<1x128xf32, #tpu.memory_space<vmem>>, %arg7: memref<16x128xf32, #tpu.memory_space<vmem>>, %arg8: memref<16x128xf32, #tpu.memory_space<vmem>>) attributes {dimension_semantics = [#tpu.dimension_semantics<parallel>, #tpu.dimension_semantics<arbitrary>], iteration_bounds = array<i64: 1, 1>, scalar_prefetch = 0 : i64, scratch_operands = 1 : i64, tpu.core_type = #tpu.core_type<tc>, window_params = [{transform_indices = @transform_0, window_bounds = array<i64: 16, 128>}, {transform_indices = @transform_1, window_bounds = array<i64: 128, 128>}, {transform_indices = @transform_2, window_bounds = array<i64: 1, 128>}, {transform_indices = @transform_3, window_bounds = array<i64: 128, 128>}, {pipeline_mode = #tpu.pipeline_mode<synchronous>, transform_indices = @transform_4, window_bounds = array<i64: 1, 128>}, {transform_indices = @transform_5, window_bounds = array<i64: 16, 128>}]} {
    %c0 = arith.constant 0 : index
    %c0_0 = arith.constant 0 : index
    %0 = vector.load %arg2[%c0, %c0_0] : memref<16x128xbf16, #tpu.memory_space<vmem>>, vector<16x128xbf16>
    %c0_1 = arith.constant 0 : index
    %c0_2 = arith.constant 0 : index
    %1 = vector.load %arg3[%c0_1, %c0_2] : memref<128x128xbf16, #tpu.memory_space<vmem>>, vector<128x128xbf16>
    %cst = arith.constant dense<0.000000e+00> : vector<16x128xf32>
    %2 = tpu.matmul %0, %1, %cst {dimension_numbers = #tpu.dot_dimension_numbers<[1], [0], [0], [1], [0, 0, 1, 1], [], []>} : vector<16x128xbf16>, vector<128x128xbf16>, vector<16x128xf32> -> vector<16x128xf32>
    %c0_3 = arith.constant 0 : index
    %c0_4 = arith.constant 0 : index
    %3 = vector.load %arg4[%c0_3, %c0_4] : memref<1x128xf32, #tpu.memory_space<vmem>>, vector<1x128xf32>
    %4 = vector.broadcast %3 : vector<1x128xf32> to vector<16x128xf32>
    %5 = arith.addf %2, %4 : vector<16x128xf32>
    %6 = arith.mulf %5, %5 : vector<16x128xf32>
    %cst_5 = arith.constant 0.0356774069 : f32
    %7 = vector.broadcast %cst_5 : f32 to vector<16x128xf32>
    %8 = arith.mulf %7, %6 : vector<16x128xf32>
    %cst_6 = arith.constant 0.797884583 : f32
    %9 = vector.broadcast %cst_6 : f32 to vector<16x128xf32>
    %10 = arith.addf %9, %8 : vector<16x128xf32>
    %11 = arith.mulf %5, %10 : vector<16x128xf32>
    %cst_7 = arith.constant 5.000000e-01 : f32
    %12 = vector.broadcast %cst_7 : f32 to vector<16x128xf32>
    %13 = arith.mulf %12, %5 : vector<16x128xf32>
    %14 = math.tanh %11 : vector<16x128xf32>
    %cst_8 = arith.constant 1.000000e+00 : f32
    %15 = vector.broadcast %cst_8 : f32 to vector<16x128xf32>
    %16 = arith.addf %15, %14 : vector<16x128xf32>
    %17 = arith.mulf %13, %16 : vector<16x128xf32>
    %18 = arith.truncf %17 : vector<16x128xf32> to vector<16x128xbf16>
    %c0_9 = arith.constant 0 : index
    %c0_10 = arith.constant 0 : index
    %19 = vector.load %arg5[%c0_9, %c0_10] : memref<128x128xbf16, #tpu.memory_space<vmem>>, vector<128x128xbf16>
    %cst_11 = arith.constant dense<0.000000e+00> : vector<16x128xf32>
    %20 = tpu.matmul %18, %19, %cst_11 {dimension_numbers = #tpu.dot_dimension_numbers<[1], [0], [0], [1], [0, 0, 1, 1], [], []>} : vector<16x128xbf16>, vector<128x128xbf16>, vector<16x128xf32> -> vector<16x128xf32>
    %c0_i32 = arith.constant 0 : i32
    %21 = arith.cmpi eq, %arg1, %c0_i32 : i32
    %22 = arith.extui %21 : i1 to i32
    %c0_i32_12 = arith.constant 0 : i32
    %23 = arith.cmpi ne, %22, %c0_i32_12 : i32
    scf.if %23 {
      %c0_17 = arith.constant 0 : index
      %c0_18 = arith.constant 0 : index
      %30 = vector.load %arg6[%c0_17, %c0_18] : memref<1x128xf32, #tpu.memory_space<vmem>>, vector<1x128xf32>
      %31 = vector.broadcast %30 : vector<1x128xf32> to vector<16x128xf32>
      %32 = arith.addf %20, %31 : vector<16x128xf32>
      %c0_19 = arith.constant 0 : index
      %c0_20 = arith.constant 0 : index
      %33 = vector.load %arg8[%c0_19, %c0_20] : memref<16x128xf32, #tpu.memory_space<vmem>>, vector<16x128xf32>
      tpu.vector_store %arg8[%c0_19, %c0_20], %32 {strides = array<i32>} : memref<16x128xf32, #tpu.memory_space<vmem>>, vector<16x128xf32>,
    } else {
    }
    %c0_i32_13 = arith.constant 0 : i32
    %24 = arith.cmpi sgt, %arg1, %c0_i32_13 : i32
    %25 = arith.extui %24 : i1 to i32
    %c0_i32_14 = arith.constant 0 : i32
    %26 = arith.cmpi ne, %25, %c0_i32_14 : i32
    scf.if %26 {
      %c0_17 = arith.constant 0 : index
      %c0_18 = arith.constant 0 : index
      %30 = vector.load %arg8[%c0_17, %c0_18] : memref<16x128xf32, #tpu.memory_space<vmem>>, vector<16x128xf32>
      %31 = arith.addf %30, %20 : vector<16x128xf32>
      %c0_19 = arith.constant 0 : index
      %c0_20 = arith.constant 0 : index
      %32 = vector.load %arg8[%c0_19, %c0_20] : memref<16x128xf32, #tpu.memory_space<vmem>>, vector<16x128xf32>
      tpu.vector_store %arg8[%c0_19, %c0_20], %31 {strides = array<i32>} : memref<16x128xf32, #tpu.memory_space<vmem>>, vector<16x128xf32>,
    } else {
    }
    %c0_i32_15 = arith.constant 0 : i32
    %27 = arith.cmpi eq, %arg1, %c0_i32_15 : i32
    %28 = arith.extui %27 : i1 to i32
    %c0_i32_16 = arith.constant 0 : i32
    %29 = arith.cmpi ne, %28, %c0_i32_16 : i32
    scf.if %29 {
      %c0_17 = arith.constant 0 : index
      %c0_18 = arith.constant 0 : index
      %30 = vector.load %arg8[%c0_17, %c0_18] : memref<16x128xf32, #tpu.memory_space<vmem>>, vector<16x128xf32>
      %c0_19 = arith.constant 0 : index
      %c0_20 = arith.constant 0 : index
      %31 = vector.load %arg7[%c0_19, %c0_20] : memref<16x128xf32, #tpu.memory_space<vmem>>, vector<16x128xf32>
      tpu.vector_store %arg7[%c0_19, %c0_20], %30 {strides = array<i32>} : memref<16x128xf32, #tpu.memory_space<vmem>>, vector<16x128xf32>,
    } else {
    }
    return
  }
  func.func @transform_0(%arg0: i32, %arg1: i32) -> (i32, i32) {
    %c0_i32 = arith.constant 0 : i32
    %c0_i32_0 = arith.constant 0 : i32
    return %arg0, %c0_i32 : i32, i32
  }
  func.func @transform_1(%arg0: i32, %arg1: i32) -> (i32, i32) {
    %c0_i32 = arith.constant 0 : i32
    %c0_i32_0 = arith.constant 0 : i32
    return %c0_i32, %arg1 : i32, i32
  }
  func.func @transform_2(%arg0: i32, %arg1: i32) -> (i32, i32) {
    %c0_i32 = arith.constant 0 : i32
    %c0_i32_0 = arith.constant 0 : i32
    return %c0_i32, %arg1 : i32, i32
  }
  func.func @transform_3(%arg0: i32, %arg1: i32) -> (i32, i32) {
    %c0_i32 = arith.constant 0 : i32
    %c0_i32_0 = arith.constant 0 : i32
    return %arg1, %c0_i32 : i32, i32
  }
  func.func @transform_4(%arg0: i32, %arg1: i32) -> (i32, i32) {
    %c0_i32 = arith.constant 0 : i32
    %c0_i32_0 = arith.constant 0 : i32
    %c0_i32_1 = arith.constant 0 : i32
    return %c0_i32, %c0_i32_0 : i32, i32
  }
  func.func @transform_5(%arg0: i32, %arg1: i32) -> (i32, i32) {
    %c0_i32 = arith.constant 0 : i32
    %c0_i32_0 = arith.constant 0 : i32
    return %arg0, %c0_i32 : i32, i32
  }
}

</mosaic_0001>

<llo_original>
// kernel: tpu_custom_call.1
$region0: #{tpu_custom_call.1}
  #allocation0 [shape = 'u32[]', space=smem, size = 0x4, offset = 0x4, fixed_abs, tag = 'smem constant byte address 0x4 - core index']
  #allocation1 [shape = 'u32[144,128]{1,0:T(1,128)}', space=vmem, size = 0x12000, scoped, tag = 'internal scratch']
  #allocation2 [shape = 'f32[16,128]{1,0:T(8,128)}', space=vmem, size = 0x2000, scoped, tag = 'scratch operand']
  %s0 = inlined_call_operand.hbm [shape: bf16[16,128], index: 0, kind: input, shape index: {}]
  %s1 = inlined_call_operand.hbm [shape: bf16[128,128], index: 1, kind: input, shape index: {}]
  %s2 = inlined_call_operand.vmem [shape: f32[1,128], index: 2, kind: input, shape index: {}]
  %s3 = inlined_call_operand.hbm [shape: bf16[128,128], index: 3, kind: input, shape index: {}]
  %s4 = inlined_call_operand.vmem [shape: f32[1,128], index: 4, kind: input, shape index: {}]
  %s5 = inlined_call_operand.hbm [shape: f32[16,128], index: 5, kind: output, shape index: {}]
  %s6 = sld [smem:[#allocation0]]
  $region54: #{tpu_custom_call.1} parent=0
    _
  %s8 = ssub.s32 1, %s6
  %s9 = scalar_select 0, %s8, %s6
  $region1: #{tpu_custom_call.1} parent=0
    #allocation3 [shape = 'u8[4096]{0}', space=vmem, size = 0x1000, scoped, tag = 'input window, operand 0, single buffered']
    #allocation4 [shape = 's32[1]{0}', space=sflag, size = 0x4, scoped, tag = 'scoped memory for tpu_custom_call.1']
    #allocation5 [shape = 's32[1]{0}', space=sflag, size = 0x4, scoped, tag = 'scoped memory for tpu_custom_call.1']
    #allocation6 [shape = 'u8[32768]{0}', space=vmem, size = 0x8000, scoped, tag = 'input window, operand 1, single buffered']
    #allocation7 [shape = 's32[1]{0}', space=sflag, size = 0x4, scoped, tag = 'scoped memory for tpu_custom_call.1']
    #allocation8 [shape = 'u8[32768]{0}', space=vmem, size = 0x8000, scoped, tag = 'input window, operand 3, single buffered']
    #allocation9 [shape = 'u8[8192]{0}', space=vmem, size = 0x2000, scoped, tag = 'output window, operand 0, single buffered']
    %10 = vsyncpa [#allocation4], 0
    %11 = vsyncpa [#allocation7], 0
    %12 = vsyncpa [#allocation5], 0
    // Predicated region
    $region2: #{tpu_custom_call.1} parent=1 // pred_check
      _
    $region3: #{tpu_custom_call.1} parent=1 // pred_check_branch
      %14 = sbr.rel (0) target = $region5
    $region4: #{tpu_custom_call.1} parent=1 // pred_region
      %s16 = ssub.s32 128, 128
      %17 = vsyncadd [#allocation4], %s16
      %s18 = sshll.u32 [#allocation3], 4
      %s19 = int_to_ptr.vmem [resolvable:$true] %s18
      %24 = dma.hbm_to_vmem [thread:$0]  %s0, 128, %s19, [#allocation4], 64, 64, 4
    $region5: #{tpu_custom_call.1} parent=1 // pred_fallthru
      _
    // Predicated region
    $region6: #{tpu_custom_call.1} parent=1 // pred_check
      _
    $region7: #{tpu_custom_call.1} parent=1 // pred_check_branch
      %26 = sbr.rel (0) target = $region9
    $region8: #{tpu_custom_call.1} parent=1 // pred_region
      %s28 = ssub.s32 1024, 1024
      %29 = vsyncadd [#allocation7], %s28
      %s30 = sshll.u32 [#allocation6], 4
      %s31 = int_to_ptr.vmem [resolvable:$true] %s30
      %36 = dma.hbm_to_vmem [thread:$0]  %s1, 1024, %s31, [#allocation7], 64, 64, 4
    $region9: #{tpu_custom_call.1} parent=1 // pred_fallthru
      _
    // Predicated region
    $region10: #{tpu_custom_call.1} parent=1 // pred_check
      _
    $region11: #{tpu_custom_call.1} parent=1 // pred_check_branch
      %38 = sbr.rel (0) target = $region13
    $region12: #{tpu_custom_call.1} parent=1 // pred_region
      _
    $region13: #{tpu_custom_call.1} parent=1 // pred_fallthru
      _
    // Predicated region
    $region14: #{tpu_custom_call.1} parent=1 // pred_check
      _
    $region15: #{tpu_custom_call.1} parent=1 // pred_check_branch
      %40 = sbr.rel (0) target = $region17
    $region16: #{tpu_custom_call.1} parent=1 // pred_region
      %s42 = ssub.s32 1024, 1024
      %43 = vsyncadd [#allocation7], %s42
      %s44 = sshll.u32 [#allocation8], 4
      %s45 = int_to_ptr.vmem [resolvable:$true] %s44
      %50 = dma.hbm_to_vmem [thread:$0]  %s3, 1024, %s45, [#allocation7], 64, 64, 4
    $region17: #{tpu_custom_call.1} parent=1 // pred_fallthru
      _
    // Predicated region
    $region18: #{tpu_custom_call.1} parent=1 // pred_check
      _
    $region19: #{tpu_custom_call.1} parent=1 // pred_check_branch
      %52 = sbr.rel (0) target = $region21
    $region20: #{tpu_custom_call.1} parent=1 // pred_region
      _
    $region21: #{tpu_custom_call.1} parent=1 // pred_fallthru
      _
    // Predicated region
    $region22: #{tpu_custom_call.1} parent=1 // pred_check
      _
    $region23: #{tpu_custom_call.1} parent=1 // pred_check_branch
      %54 = sbr.rel (0) target = $region25
    $region24: #{tpu_custom_call.1} parent=1 // pred_region
      %55 = dma.done [#allocation4], 128
    $region25: #{tpu_custom_call.1} parent=1 // pred_fallthru
      _
    // Predicated region
    $region26: #{tpu_custom_call.1} parent=1 // pred_check
      _
    $region27: #{tpu_custom_call.1} parent=1 // pred_check_branch
      %57 = sbr.rel (0) target = $region29
    $region28: #{tpu_custom_call.1} parent=1 // pred_region
      %58 = dma.done [#allocation7], 1024
    $region29: #{tpu_custom_call.1} parent=1 // pred_fallthru
      _
    // Predicated region
    $region30: #{tpu_custom_call.1} parent=1 // pred_check
      _
    $region31: #{tpu_custom_call.1} parent=1 // pred_check_branch
      %60 = sbr.rel (0) target = $region33
    $region32: #{tpu_custom_call.1} parent=1 // pred_region
      %61 = dma.done [#allocation7], 1024
    $region33: #{tpu_custom_call.1} parent=1 // pred_fallthru
      _
    %v63 = vld [vmem:[#allocation3] sm:$0xf]
    %v64 = vld [vmem:[#allocation3 + $0x4] sm:$0xf]
    %v65 = vld [vmem:[#allocation6] sm:$0xf]
    %v66 = vld [vmem:[#allocation6 + $0x4] sm:$0xf]
    %v67 = vld [vmem:[#allocation6 + $0x8] sm:$0xf]
    %v68 = vld [vmem:[#allocation6 + $0xc] sm:$0xf]
    %v69 = vld [vmem:[#allocation6 + $0x10] sm:$0xf]
    %v70 = vld [vmem:[#allocation6 + $0x14] sm:$0xf]
    %v71 = vld [vmem:[#allocation6 + $0x18] sm:$0xf]
    %v72 = vld [vmem:[#allocation6 + $0x1c] sm:$0xf]
    %v73 = vld [vmem:[#allocation6 + $0x20] sm:$0xf]
    %v74 = vld [vmem:[#allocation6 + $0x24] sm:$0xf]
    %v75 = vld [vmem:[#allocation6 + $0x28] sm:$0xf]
    %v76 = vld [vmem:[#allocation6 + $0x2c] sm:$0xf]
    %v77 = vld [vmem:[#allocation6 + $0x30] sm:$0xf]
    %v78 = vld [vmem:[#allocation6 + $0x34] sm:$0xf]
    %v79 = vld [vmem:[#allocation6 + $0x38] sm:$0xf]
    %v80 = vld [vmem:[#allocation6 + $0x3c] sm:$0xf]
    %v81 = vld [vmem:[%s2] sm:$0x1]
    %v83 = vlaneseq
    %v84 = vshrl.u32 %v83, 7
    %v85 = vsub.s32 0, %v84
    %v86 = vrot.slane %v81, %v85
    %v90 = vunpack.c.l.b16 %v63
    %v91 = vunpack.c.l.b16 %v64
    %v92 = vpack.c.b16 %v91, %v90
    %v110 = vunpack.c.l.b16 %v65
    %v111 = vunpack.c.l.b16 %v66
    %v112 = vunpack.c.l.b16 %v67
    %v113 = vunpack.c.l.b16 %v68
    %v114 = vunpack.c.l.b16 %v69
    %v115 = vunpack.c.l.b16 %v70
    %v116 = vunpack.c.l.b16 %v71
    %v117 = vunpack.c.l.b16 %v72
    %v118 = vunpack.c.l.b16 %v73
    %v119 = vunpack.c.l.b16 %v74
    %v120 = vunpack.c.l.b16 %v75
    %v121 = vunpack.c.l.b16 %v76
    %v122 = vunpack.c.l.b16 %v77
    %v123 = vunpack.c.l.b16 %v78
    %v124 = vunpack.c.l.b16 %v79
    %v125 = vunpack.c.l.b16 %v80
    %v126 = vpack.c.b16 %v111, %v110
    %v127 = vpack.c.b16 %v113, %v112
    %v128 = vpack.c.b16 %v115, %v114
    %v129 = vpack.c.b16 %v117, %v116
    %v130 = vpack.c.b16 %v119, %v118
    %v131 = vpack.c.b16 %v121, %v120
    %v132 = vpack.c.b16 %v123, %v122
    %v133 = vpack.c.b16 %v125, %v124
    %142 = vmatprep.subr.bf16.mxu0 0
    %143 = vmatpush1.bf16.msra.mxu0 %v126
    %144 = vmatprep.subr.bf16.mxu0 0
    %145 = vmatpush1.bf16.msra.mxu0 %v127
    %146 = vmatprep.subr.bf16.mxu0 0
    %147 = vmatpush1.bf16.msra.mxu0 %v128
    %148 = vmatprep.subr.bf16.mxu0 0
    %149 = vmatpush1.bf16.msra.mxu0 %v129
    %150 = vmatprep.subr.bf16.mxu0 0
    %151 = vmatpush1.bf16.msra.mxu0 %v130
    %152 = vmatprep.subr.bf16.mxu0 0
    %153 = vmatpush1.bf16.msra.mxu0 %v131
    %154 = vmatprep.subr.bf16.mxu0 0
    %155 = vmatpush1.bf16.msra.mxu0 %v132
    %156 = vmatprep.subr.bf16.mxu0 0
    %157 = vmatpush1.bf16.msra.mxu0 %v133
    %158 = vmatprep.subr.bf16.mxu0 0
    %159 = vmatpush1.bf16.msra.mxu0 0
    %160 = vmatprep.subr.bf16.mxu0 0
    %161 = vmatpush1.bf16.msra.mxu0 0
    %162 = vmatprep.subr.bf16.mxu0 0
    %163 = vmatpush1.bf16.msra.mxu0 0
    %164 = vmatprep.subr.bf16.mxu0 0
    %165 = vmatpush1.bf16.msra.mxu0 0
    %166 = vmatprep.subr.bf16.mxu0 0
    %167 = vmatpush1.bf16.msra.mxu0 0
    %168 = vmatprep.subr.bf16.mxu0 0
    %169 = vmatpush1.bf16.msra.mxu0 0
    %170 = vmatprep.subr.bf16.mxu0 0
    %171 = vmatpush1.bf16.msra.mxu0 0
    %172 = vmatprep.subr.bf16.mxu0 0
    %173 = vmatpush1.bf16.msra.mxu0 0
    %174 = vmatprep.mubr.bf16.mxu0 0
    %175 = vmatmul.mubr.bf16.gmra.mrb[0].mxu0 %v92
    %v176 = vpop.f32.mrb[0].mxu0
    %v177 = vadd.f32 %v86, %v176
    %v178 = vpop.f32.mrb[0].mxu0
    %v179 = vpop.f32.mrb[0].mxu0
    %v180 = vadd.f32 %v86, %v179
    %v181 = vpop.f32.mrb[0].mxu0
    %182 = vdwg.mxu0
    %v183 = vmul.f32 %v177, %v177
    %v184 = vmul.f32 %v180, %v180
    %v185 = vmul.f32 %v183, 0.035677407
    %v186 = vmul.f32 %v184, 0.035677407
    %v187 = vadd.f32 %v185, 0.7978846
    %v188 = vadd.f32 %v186, 0.7978846
    %v189 = vmul.f32 %v177, %v187
    %v190 = vmul.f32 %v180, %v188
    %v191 = vmul.f32 %v177, 0.5
    %v192 = vmul.f32 %v180, 0.5
    %v193 = vtanh.pop %v189
    %v194 = vtanh.pop %v190
    %v195 = vadd.f32 %v193, 1.0
    %v196 = vadd.f32 %v194, 1.0
    %v197 = vmul.f32 %v191, %v195
    %v198 = vmul.f32 %v192, %v196
    %v199 = vpack.c.bf16 %v198, %v197
    %v200 = vld [vmem:[#allocation8] sm:$0xf]
    %v201 = vld [vmem:[#allocation8 + $0x4] sm:$0xf]
    %v202 = vld [vmem:[#allocation8 + $0x8] sm:$0xf]
    %v203 = vld [vmem:[#allocation8 + $0xc] sm:$0xf]
    %v204 = vld [vmem:[#allocation8 + $0x10] sm:$0xf]
    %v205 = vld [vmem:[#allocation8 + $0x14] sm:$0xf]
    %v206 = vld [vmem:[#allocation8 + $0x18] sm:$0xf]
    %v207 = vld [vmem:[#allocation8 + $0x1c] sm:$0xf]
    %v208 = vld [vmem:[#allocation8 + $0x20] sm:$0xf]
    %v209 = vld [vmem:[#allocation8 + $0x24] sm:$0xf]
    %v210 = vld [vmem:[#allocation8 + $0x28] sm:$0xf]
    %v211 = vld [vmem:[#allocation8 + $0x2c] sm:$0xf]
    %v212 = vld [vmem:[#allocation8 + $0x30] sm:$0xf]
    %v213 = vld [vmem:[#allocation8 + $0x34] sm:$0xf]
    %v214 = vld [vmem:[#allocation8 + $0x38] sm:$0xf]
    %v215 = vld [vmem:[#allocation8 + $0x3c] sm:$0xf]
    %v232 = vunpack.c.l.b16 %v200
    %v233 = vunpack.c.l.b16 %v201
    %v234 = vunpack.c.l.b16 %v202
    %v235 = vunpack.c.l.b16 %v203
    %v236 = vunpack.c.l.b16 %v204
    %v237 = vunpack.c.l.b16 %v205
    %v238 = vunpack.c.l.b16 %v206
    %v239 = vunpack.c.l.b16 %v207
    %v240 = vunpack.c.l.b16 %v208
    %v241 = vunpack.c.l.b16 %v209
    %v242 = vunpack.c.l.b16 %v210
    %v243 = vunpack.c.l.b16 %v211
    %v244 = vunpack.c.l.b16 %v212
    %v245 = vunpack.c.l.b16 %v213
    %v246 = vunpack.c.l.b16 %v214
    %v247 = vunpack.c.l.b16 %v215
    %v248 = vpack.c.b16 %v233, %v232
    %v249 = vpack.c.b16 %v235, %v234
    %v250 = vpack.c.b16 %v237, %v236
    %v251 = vpack.c.b16 %v239, %v238
    %v252 = vpack.c.b16 %v241, %v240
    %v253 = vpack.c.b16 %v243, %v242
    %v254 = vpack.c.b16 %v245, %v244
    %v255 = vpack.c.b16 %v247, %v246
    %264 = vmatprep.subr.bf16.mxu0 0
    %265 = vmatpush1.bf16.msra.mxu0 %v248
    %266 = vmatprep.subr.bf16.mxu0 0
    %267 = vmatpush1.bf16.msra.mxu0 %v249
    %268 = vmatprep.subr.bf16.mxu0 0
    %269 = vmatpush1.bf16.msra.mxu0 %v250
    %270 = vmatprep.subr.bf16.mxu0 0
    %271 = vmatpush1.bf16.msra.mxu0 %v251
    %272 = vmatprep.subr.bf16.mxu0 0
    %273 = vmatpush1.bf16.msra.mxu0 %v252
    %274 = vmatprep.subr.bf16.mxu0 0
    %275 = vmatpush1.bf16.msra.mxu0 %v253
    %276 = vmatprep.subr.bf16.mxu0 0
    %277 = vmatpush1.bf16.msra.mxu0 %v254
    %278 = vmatprep.subr.bf16.mxu0 0
    %279 = vmatpush1.bf16.msra.mxu0 %v255
    %280 = vmatprep.subr.bf16.mxu0 0
    %281 = vmatpush1.bf16.msra.mxu0 0
    %282 = vmatprep.subr.bf16.mxu0 0
    %283 = vmatpush1.bf16.msra.mxu0 0
    %284 = vmatprep.subr.bf16.mxu0 0
    %285 = vmatpush1.bf16.msra.mxu0 0
    %286 = vmatprep.subr.bf16.mxu0 0
    %287 = vmatpush1.bf16.msra.mxu0 0
    %288 = vmatprep.subr.bf16.mxu0 0
    %289 = vmatpush1.bf16.msra.mxu0 0
    %290 = vmatprep.subr.bf16.mxu0 0
    %291 = vmatpush1.bf16.msra.mxu0 0
    %292 = vmatprep.subr.bf16.mxu0 0
    %293 = vmatpush1.bf16.msra.mxu0 0
    %294 = vmatprep.subr.bf16.mxu0 0
    %295 = vmatpush1.bf16.msra.mxu0 0
    %296 = vmatprep.mubr.bf16.mxu0 0
    %297 = vmatmul.mubr.bf16.gmra.mrb[0].mxu0 %v199
    %v298 = vpop.f32.mrb[0].mxu0
    %v299 = vadd.f32 0.0, %v298
    %v300 = vpop.f32.mrb[0].mxu0
    %v301 = vpop.f32.mrb[0].mxu0
    %v302 = vadd.f32 0.0, %v301
    %v303 = vpop.f32.mrb[0].mxu0
    %304 = vdwg.mxu0
    %p305 = scmp.eq.s32.totalorder 0, 0
    // Predicated region
    $region34: #{tpu_custom_call.1} parent=1 // pred_check
      %p306 = pneg %p305
    $region35: #{tpu_custom_call.1} parent=1 // pred_check_branch
      %308 = sbr.rel (%p306) target = $region37
    $region36: #{tpu_custom_call.1} parent=1 // pred_region
      %v309 = vld [vmem:[%s4] sm:$0x1]
      %v311 = vlaneseq
      %v312 = vshrl.u32 %v311, 7
      %v313 = vsub.s32 0, %v312
      %v314 = vrot.slane %v309, %v313
      %v316 = vadd.f32 %v299, %v314
      %v317 = vadd.f32 %v302, %v314
      %318 = vst [vmem:[#allocation2] sm:$0xff] %v316
      %319 = vst [vmem:[#allocation2 + $0x8] sm:$0xff] %v317
    $region37: #{tpu_custom_call.1} parent=1 // pred_fallthru
      _
    %p320 = scmp.gt.s32.totalorder 0, 0
    // Predicated region
    $region38: #{tpu_custom_call.1} parent=1 // pred_check
      %p321 = pneg %p320
    $region39: #{tpu_custom_call.1} parent=1 // pred_check_branch
      %323 = sbr.rel (%p321) target = $region41
    $region40: #{tpu_custom_call.1} parent=1 // pred_region
      %v324 = vld [vmem:[#allocation2] sm:$0xff]
      %v325 = vld [vmem:[#allocation2 + $0x8] sm:$0xff]
      %v326 = vadd.f32 %v324, %v299
      %v327 = vadd.f32 %v325, %v302
      %328 = vst [vmem:[#allocation2] sm:$0xff] %v326
      %329 = vst [vmem:[#allocation2 + $0x8] sm:$0xff] %v327
    $region41: #{tpu_custom_call.1} parent=1 // pred_fallthru
      _
    // Predicated region
    $region42: #{tpu_custom_call.1} parent=1 // pred_check
      %p330 = pneg %p305
    $region43: #{tpu_custom_call.1} parent=1 // pred_check_branch
      %332 = sbr.rel (%p330) target = $region45
    $region44: #{tpu_custom_call.1} parent=1 // pred_region
      %v333 = vld [vmem:[#allocation2] sm:$0xff]
      %v334 = vld [vmem:[#allocation2 + $0x8] sm:$0xff]
      %335 = vst [vmem:[#allocation9] sm:$0xff] %v333
      %336 = vst [vmem:[#allocation9 + $0x8] sm:$0xff] %v334
    $region45: #{tpu_custom_call.1} parent=1 // pred_fallthru
      _
    // Predicated region
    $region46: #{tpu_custom_call.1} parent=1 // pred_check
      _
    $region47: #{tpu_custom_call.1} parent=1 // pred_check_branch
      %338 = sbr.rel (0) target = $region49
    $region48: #{tpu_custom_call.1} parent=1 // pred_region
      %s340 = ssub.s32 256, 256
      %341 = vsyncadd [#allocation5], %s340
      %s342 = sshll.u32 [#allocation9], 4
      %s343 = int_to_ptr.vmem [resolvable:$true] %s342
      %348 = dma.vmem_to_hbm [thread:$0]  %s343, 256, %s5, [#allocation5], 128, 128, 8
    $region49: #{tpu_custom_call.1} parent=1 // pred_fallthru
      _
    // Predicated region
    $region50: #{tpu_custom_call.1} parent=1 // pred_check
      _
    $region51: #{tpu_custom_call.1} parent=1 // pred_check_branch
      %350 = sbr.rel (0) target = $region53
    $region52: #{tpu_custom_call.1} parent=1 // pred_region
      %351 = dma.done [#allocation5], 256
    $region53: #{tpu_custom_call.1} parent=1 // pred_fallthru
      _
    %352 = vsyncpa [#allocation4], 1
    %353 = vsyncpa [#allocation7], 1
    %354 = vsyncpa [#allocation5], 1

</llo_original>
